<compile_context>
chip_gen: v5e
topology: v5e:2x2
jax: 0.10.0
libtpu: 0.0.40
codegen_flags: <defaults>
</compile_context>

<pallas_src>
import jax
import jax.numpy as jnp
from jax.experimental import pallas as pl
from jax.experimental.pallas import tpu as pltpu


# ---------------------------------------------------------------------------
# Kernels
# ---------------------------------------------------------------------------
def _quartz_kernel(x_ref, w_ref, b_ref, o_ref):
    # x_ref : (1, K*Cin, TM)   tap-unfolded input tile
    # w_ref : (Cout, K*Cin)    fully folded weight (conv+conv1x1+shuffle+BN)
    # b_ref : (Cout, 1)        fully folded bias
    # o_ref : (1, Cout, TM)
    y = jnp.dot(w_ref[...], x_ref[0], preferred_element_type=jnp.float32)
    y = y + b_ref[...]
    o_ref[0] = jnp.maximum(y, 0.0).astype(o_ref.dtype)


def _quartz_kernel_res(x_ref, r_ref, w_ref, b_ref, o_ref):
    y = jnp.dot(w_ref[...], x_ref[0], preferred_element_type=jnp.float32)
    y = y + b_ref[...] + r_ref[0].astype(jnp.float32)
    o_ref[0] = jnp.maximum(y, 0.0).astype(o_ref.dtype)


# ---------------------------------------------------------------------------
# Wrapper
# ---------------------------------------------------------------------------
def quartz_subblock(x, w_dw, b_dw, w_pw, b_pw, gamma, beta, run_mean, run_var,
                    groups, residual=None, eps=1e-5, tm=None):
    """QuartzSubBlock forward (inference).

    x        : [B, Cin, M] float32
    w_dw     : [Cout, Cin//G, K]  grouped "dwise_conv" weight (PyTorch layout)
    b_dw     : [Cout]
    w_pw     : [Cout, Cout//G, 1] grouped 1x1 conv weight
    b_pw     : [Cout]
    gamma, beta, run_mean, run_var : [Cout]  BatchNorm1d (eval mode) params
    residual : optional [B, Cout, M]
    """
    B, Cin, M = x.shape
    Cout, CinG, K = w_dw.shape
    G = groups
    CoutG = Cout // G
    assert Cin % G == 0 and Cout % G == 0 and CinG == Cin // G
    dtype = x.dtype
    hp = jax.lax.Precision.HIGHEST

    # --- time-tile size: multiple of 128, sized to keep double-buffered tiles
    #     comfortably inside the scoped-VMEM budget, capped at 512.
    if tm is None:
        row_bytes = 4 * (K * Cin + 3 * Cout)          # in + out + residual columns
        budget = 12 * 1024 * 1024                     # per-buffer-set share of VMEM
        tm = max(128, min(512, (budget // (2 * row_bytes)) // 128 * 128))
        tm = min(tm, ((M + 127) // 128) * 128)
    mpad = ((M + tm - 1) // tm) * tm

    pad_l = (K - 1) // 2                              # PyTorch padding='same', stride 1

    # --- tap-unfolded, zero-padded input: xcol[b, k*Cin + ci, m] = xpad[b, ci, m + k]
    xpad = jnp.zeros((B, Cin, mpad + K - 1), dtype).at[:, :, pad_l:pad_l + M].set(x)
    xcol = jnp.concatenate([xpad[:, :, k:k + mpad] for k in range(K)], axis=1)

    # --- grouped K-tap conv as a block-diagonal, tap-major dense weight
    w1_full = jnp.zeros((Cout, Cin, K), jnp.float32)
    for g in range(G):
        w1_full = w1_full.at[g * CoutG:(g + 1) * CoutG,
                             g * CinG:(g + 1) * CinG, :].set(
            w_dw[g * CoutG:(g + 1) * CoutG].astype(jnp.float32))
    w1_unf = jnp.transpose(w1_full, (0, 2, 1)).reshape(Cout, K * Cin)
    b1 = b_dw.astype(jnp.float32)

    # --- grouped 1x1 conv (block-diag) + GroupsShuffle (row permutation)
    #     + eval-mode BatchNorm (per-channel scale/shift)
    w2_full = jnp.zeros((Cout, Cout), jnp.float32)
    for g in range(G):
        w2_full = w2_full.at[g * CoutG:(g + 1) * CoutG,
                             g * CoutG:(g + 1) * CoutG].set(
            w_pw[g * CoutG:(g + 1) * CoutG, :, 0].astype(jnp.float32))
    c_new = jnp.arange(Cout)
    perm = (c_new % G) * CoutG + (c_new // G)         # shuffled[c_new] = orig[perm[c_new]]
    w2_shuf = w2_full[perm]
    b2_shuf = b_pw.astype(jnp.float32)[perm]
    scale = gamma.astype(jnp.float32) / jnp.sqrt(run_var.astype(jnp.float32) + eps)
    shift = beta.astype(jnp.float32) - run_mean.astype(jnp.float32) * scale
    w2_eff = scale[:, None] * w2_shuf
    b2_eff = scale * b2_shuf + shift

    # --- fold the whole linear chain into one weight/bias (single MXU matmul/tile)
    w_eff = jnp.dot(w2_eff, w1_unf, precision=hp)                 # [Cout, K*Cin]
    b_eff = (jnp.dot(w2_eff, b1[:, None], precision=hp)[:, 0]
             + b2_eff).reshape(Cout, 1)                           # [Cout, 1]

    # --- pallas_call
    kernel = _quartz_kernel
    in_specs = [pl.BlockSpec((1, K * Cin, tm), lambda b, j: (b, 0, j))]
    inputs = [xcol]
    if residual is not None:
        kernel = _quartz_kernel_res
        rpad = jnp.zeros((B, Cout, mpad), dtype).at[:, :, :M].set(
            residual.astype(dtype))
        in_specs.append(pl.BlockSpec((1, Cout, tm), lambda b, j: (b, 0, j)))
        inputs.append(rpad)
    in_specs += [
        pl.BlockSpec((Cout, K * Cin), lambda b, j: (0, 0)),       # w_eff (constant)
        pl.BlockSpec((Cout, 1), lambda b, j: (0, 0)),             # b_eff
    ]
    inputs += [w_eff, b_eff]

    itemsize = jnp.dtype(dtype).itemsize
    bytes_accessed = int(
        B * K * Cin * mpad * itemsize
        + B * Cout * mpad * itemsize * (2 if residual is not None else 1)
        + 4 * (Cout * K * Cin + Cout))
    flops = int(2 * B * mpad * Cout * K * Cin)

    out = pl.pallas_call(
        kernel,
        out_shape=jax.ShapeDtypeStruct((B, Cout, mpad), dtype),
        grid=(B, mpad // tm),
        in_specs=in_specs,
        out_specs=pl.BlockSpec((1, Cout, tm), lambda b, j: (b, 0, j)),
        compiler_params=pltpu.CompilerParams(
            dimension_semantics=("parallel", "parallel")),
        cost_estimate=pl.CostEstimate(
            flops=flops, transcendentals=0, bytes_accessed=bytes_accessed),
    )(*inputs)
    return out[:, :, :M]


# ---------------------------------------------------------------------------
# Pure-JAX reference (faithful mirror of the PyTorch forward, eval mode)
# ---------------------------------------------------------------------------
def _reference(x, residual, w_dw, b_dw, w_pw, b_pw, gamma, beta, run_mean,
               run_var, eps, groups):
    B, Cin, M = x.shape
    Cout, _, K = w_dw.shape
    pad_l = (K - 1) // 2
    pad_r = (K - 1) - pad_l
    hp = jax.lax.Precision.HIGHEST

    y = jax.lax.conv_general_dilated(
        x, w_dw, window_strides=(1,), padding=[(pad_l, pad_r)],
        dimension_numbers=('NCH', 'OIH', 'NCH'),
        feature_group_count=groups, precision=hp) + b_dw[None, :, None]
    y = jax.lax.conv_general_dilated(
        y, w_pw, window_strides=(1,), padding=[(0, 0)],
        dimension_numbers=('NCH', 'OIH', 'NCH'),
        feature_group_count=groups, precision=hp) + b_pw[None, :, None]
    # GroupsShuffle
    CoutG = Cout // groups
    y = y.reshape(B, groups, CoutG, M).transpose(0, 2, 1, 3).reshape(B, Cout, M)
    # BatchNorm1d (eval)
    scale = gamma / jnp.sqrt(run_var + eps)
    y = scale[None, :, None] * (y - run_mean[None, :, None]) + beta[None, :, None]
    if residual is not None:
        y = y + residual
    return jnp.maximum(y, 0.0)


if __name__ == "__main__":
    B, Cin, Cout, M = 2, 8, 8, 16
    K, G = 3, 2
    eps = 1e-5

    key = jax.random.PRNGKey(0)
    ks = jax.random.split(key, 10)
    x = jax.random.normal(ks[0], (B, Cin, M), jnp.float32)
    residual = jax.random.normal(ks[1], (B, Cout, M), jnp.float32)
    w_dw = 0.1 * jax.random.normal(ks[2], (Cout, Cin // G, K), jnp.float32)
    b_dw = 0.1 * jax.random.normal(ks[3], (Cout,), jnp.float32)
    w_pw = 0.1 * jax.random.normal(ks[4], (Cout, Cout // G, 1), jnp.float32)
    b_pw = 0.1 * jax.random.normal(ks[5], (Cout,), jnp.float32)
    gamma = 1.0 + 0.1 * jax.random.normal(ks[6], (Cout,), jnp.float32)
    beta = 0.1 * jax.random.normal(ks[7], (Cout,), jnp.float32)
    run_mean = 0.1 * jax.random.normal(ks[8], (Cout,), jnp.float32)
    run_var = jax.random.uniform(ks[9], (Cout,), jnp.float32, 0.5, 1.5)

    # with residual
    out = quartz_subblock(x, w_dw, b_dw, w_pw, b_pw, gamma, beta, run_mean,
                          run_var, G, residual=residual, eps=eps)
    out = jax.block_until_ready(out)
    ref = _reference(x, residual, w_dw, b_dw, w_pw, b_pw, gamma, beta,
                     run_mean, run_var, eps, G)
    assert out.shape == (B, Cout, M)
    assert jnp.allclose(out, ref, atol=1e-3, rtol=1e-3), (
        float(jnp.max(jnp.abs(out - ref))))

    # without residual
    out2 = quartz_subblock(x, w_dw, b_dw, w_pw, b_pw, gamma, beta, run_mean,
                           run_var, G, residual=None, eps=eps)
    out2 = jax.block_until_ready(out2)
    ref2 = _reference(x, None, w_dw, b_dw, w_pw, b_pw, gamma, beta,
                      run_mean, run_var, eps, G)
    assert jnp.allclose(out2, ref2, atol=1e-3, rtol=1e-3), (
        float(jnp.max(jnp.abs(out2 - ref2))))

    print("KERNEL_OK")
</pallas_src>

<mosaic_0001>
module attributes {stable_mosaic.version = 11 : i64} {
  func.func @_quartz_kernel_res(%arg0: i32, %arg1: i32, %arg2: memref<1x24x128xf32, #tpu.memory_space<vmem>>, %arg3: memref<1x8x128xf32, #tpu.memory_space<vmem>>, %arg4: memref<8x24xf32, #tpu.memory_space<vmem>>, %arg5: memref<8x1xf32, #tpu.memory_space<vmem>>, %arg6: memref<1x8x128xf32, #tpu.memory_space<vmem>>) attributes {dimension_semantics = [#tpu.dimension_semantics<parallel>, #tpu.dimension_semantics<parallel>], iteration_bounds = array<i64: 2, 1>, scalar_prefetch = 0 : i64, scratch_operands = 0 : i64, tpu.core_type = #tpu.core_type<tc>, window_params = [{transform_indices = @transform_0, window_bounds = array<i64: 1, 24, 128>}, {transform_indices = @transform_1, window_bounds = array<i64: 1, 8, 128>}, {pipeline_mode = #tpu.pipeline_mode<synchronous>, transform_indices = @transform_2, window_bounds = array<i64: 8, 24>}, {pipeline_mode = #tpu.pipeline_mode<synchronous>, transform_indices = @transform_3, window_bounds = array<i64: 8, 1>}, {transform_indices = @transform_4, window_bounds = array<i64: 1, 8, 128>}]} {
    %c0 = arith.constant 0 : index
    %c0_0 = arith.constant 0 : index
    %0 = vector.load %arg4[%c0, %c0_0] : memref<8x24xf32, #tpu.memory_space<vmem>>, vector<8x24xf32>
    %c0_1 = arith.constant 0 : index
    %c0_2 = arith.constant 0 : index
    %c0_3 = arith.constant 0 : index
    %1 = vector.load %arg2[%c0_1, %c0_2, %c0_3] : memref<1x24x128xf32, #tpu.memory_space<vmem>>, vector<1x24x128xf32>
    %2 = vector.shape_cast %1 : vector<1x24x128xf32> to vector<24x128xf32>
    %cst = arith.constant dense<0.000000e+00> : vector<8x128xf32>
    %3 = tpu.matmul %0, %2, %cst {dimension_numbers = #tpu.dot_dimension_numbers<[1], [0], [0], [1], [0, 0, 1, 1], [], []>} : vector<8x24xf32>, vector<24x128xf32>, vector<8x128xf32> -> vector<8x128xf32>
    %c0_4 = arith.constant 0 : index
    %c0_5 = arith.constant 0 : index
    %4 = vector.load %arg5[%c0_4, %c0_5] : memref<8x1xf32, #tpu.memory_space<vmem>>, vector<8x1xf32>
    %5 = vector.broadcast %4 : vector<8x1xf32> to vector<8x128xf32>
    %6 = arith.addf %3, %5 : vector<8x128xf32>
    %c0_6 = arith.constant 0 : index
    %c0_7 = arith.constant 0 : index
    %c0_8 = arith.constant 0 : index
    %7 = vector.load %arg3[%c0_6, %c0_7, %c0_8] : memref<1x8x128xf32, #tpu.memory_space<vmem>>, vector<1x8x128xf32>
    %8 = vector.shape_cast %7 : vector<1x8x128xf32> to vector<8x128xf32>
    %9 = arith.addf %6, %8 : vector<8x128xf32>
    %cst_9 = arith.constant 0.000000e+00 : f32
    %10 = vector.broadcast %cst_9 : f32 to vector<8x128xf32>
    %11 = arith.maximumf %9, %10 : vector<8x128xf32>
    %c0_10 = arith.constant 0 : index
    %c0_11 = arith.constant 0 : index
    %c0_12 = arith.constant 0 : index
    %12 = vector.load %arg6[%c0_10, %c0_11, %c0_12] : memref<1x8x128xf32, #tpu.memory_space<vmem>>, vector<1x8x128xf32>
    %13 = vector.shape_cast %12 : vector<1x8x128xf32> to vector<8x128xf32>
    %14 = vector.shape_cast %11 : vector<8x128xf32> to vector<1x8x128xf32>
    tpu.vector_store %arg6[%c0_10, %c0_11, %c0_12], %14 {strides = array<i32>} : memref<1x8x128xf32, #tpu.memory_space<vmem>>, vector<1x8x128xf32>,
    return
  }
  func.func @transform_0(%arg0: i32, %arg1: i32) -> (i32, i32, i32) {
    %c0_i32 = arith.constant 0 : i32
    %c0_i32_0 = arith.constant 0 : i32
    return %arg0, %c0_i32, %arg1 : i32, i32, i32
  }
  func.func @transform_1(%arg0: i32, %arg1: i32) -> (i32, i32, i32) {
    %c0_i32 = arith.constant 0 : i32
    %c0_i32_0 = arith.constant 0 : i32
    return %arg0, %c0_i32, %arg1 : i32, i32, i32
  }
  func.func @transform_2(%arg0: i32, %arg1: i32) -> (i32, i32) {
    %c0_i32 = arith.constant 0 : i32
    %c0_i32_0 = arith.constant 0 : i32
    %c0_i32_1 = arith.constant 0 : i32
    return %c0_i32, %c0_i32_0 : i32, i32
  }
  func.func @transform_3(%arg0: i32, %arg1: i32) -> (i32, i32) {
    %c0_i32 = arith.constant 0 : i32
    %c0_i32_0 = arith.constant 0 : i32
    %c0_i32_1 = arith.constant 0 : i32
    return %c0_i32, %c0_i32_0 : i32, i32
  }
  func.func @transform_4(%arg0: i32, %arg1: i32) -> (i32, i32, i32) {
    %c0_i32 = arith.constant 0 : i32
    %c0_i32_0 = arith.constant 0 : i32
    return %arg0, %c0_i32, %arg1 : i32, i32, i32
  }
}

</mosaic_0001>

<llo_original>
// kernel: tpu_custom_call.1
$region0: #{tpu_custom_call.1}
  #allocation0 [shape = 'u32[]', space=smem, size = 0x4, offset = 0x4, fixed_abs, tag = 'smem constant byte address 0x4 - core index']
  #allocation1 [shape = 'u32[72,128]{1,0:T(1,128)}', space=vmem, size = 0x9000, scoped, tag = 'internal scratch']
  %s0 = inlined_call_operand.hbm [shape: f32[2,24,128], index: 0, kind: input, shape index: {}]
  %s1 = inlined_call_operand.hbm [shape: f32[2,8,128], index: 1, kind: input, shape index: {}]
  %s2 = inlined_call_operand.vmem [shape: f32[8,24], index: 2, kind: input, shape index: {}]
  %s3 = inlined_call_operand.vmem [shape: f32[8,1], index: 3, kind: input, shape index: {}]
  %s4 = inlined_call_operand.hbm [shape: f32[2,8,128], index: 4, kind: output, shape index: {}]
  %s5 = sld [smem:[#allocation0]]
  $region57: #{tpu_custom_call.1} parent=0
    _
  %s7 = ssub.s32 1, %s5
  %s8 = scalar_select 0, %s7, %s5
  $region1: #{tpu_custom_call.1} parent=0
    #allocation2 [shape = 'u8[24576]{0}', space=vmem, size = 0x6000, scoped, tag = 'input window, operand 0']
    #allocation3 [shape = 's32[2]{0}', space=sflag, size = 0x8, scoped, tag = 'scoped memory for tpu_custom_call.1']
    #allocation4 [shape = 's32[2]{0}', space=sflag, size = 0x8, scoped, tag = 'scoped memory for tpu_custom_call.1']
    #allocation5 [shape = 'u8[8192]{0}', space=vmem, size = 0x2000, scoped, tag = 'input window, operand 1']
    #allocation6 [shape = 's32[2]{0}', space=sflag, size = 0x8, scoped, tag = 'scoped memory for tpu_custom_call.1']
    #allocation7 [shape = 'u8[8192]{0}', space=vmem, size = 0x2000, scoped, tag = 'output window, operand 0']
    %9 = vsyncpa [#allocation3], 0
    %s10 = scalar_lea.sflag [#allocation3], 1
    %11 = vsyncpa %s10, 0
    %12 = vsyncpa [#allocation6], 0
    %s13 = scalar_lea.sflag [#allocation6], 1
    %14 = vsyncpa %s13, 0
    %15 = vsyncpa [#allocation4], 0
    %s16 = scalar_lea.sflag [#allocation4], 1
    %17 = vsyncpa %s16, 0
    loop: start=0, step=1, limit=4
    $region2: #{tpu_custom_call.1} parent=1 // loop_pre_header
      _
    $region3: #{tpu_custom_call.1} parent=1 // loop_header
      %s19 = sphi 0, %s23
      %p20 = scmp.ge.s32.totalorder %s19, 4
      %s26 = sphi 0, %s38
      %s27 = sphi 0, %s34
      %s28 = sphi 0, %s26
      %s29 = sphi 0, %s27
      %s30 = sphi 0, %s28
      %s31 = sphi 0, %s29
      %s43 = sphi 0, %s45
      %s46 = sphi 0, %s43
      %s47 = sphi 0, %s46
      %s63 = sphi 0, %s47
      %s71 = sphi 0, %s73
      %s74 = sphi 0, %s71
      %s75 = sphi 0, %s74
      %s91 = sphi 0, %s75
      %s95 = sphi 0, %s95
      %s97 = sphi 0, %s95
      %s98 = sphi 0, %s97
      %s112 = sphi 0, %s98
      %s116 = sphi 0, %s116
      %s118 = sphi 0, %s116
      %s119 = sphi 0, %s118
      %s133 = sphi 0, %s119
      %s141 = sphi 0, %s143
      %s144 = sphi 0, %s141
      %s145 = sphi 0, %s144
      %s161 = sphi 0, %s145
    $region4: #{tpu_custom_call.1} parent=1 // loop_header_branch
      %22 = sbr.rel (%p20) target = $region8
    $region5: #{tpu_custom_call.1} parent=1 // loop_body
      %s24 = ssub.s32 %s19, 1
      %s25 = ssub.s32 %s19, 2
      %s32 = sadd.s32 1, %s27
      %p33 = scmp.ge.s32.totalorder %s32, 1
      %s34 = scalar_select %p33, 0, %s32
      %s35 = sadd.s32 1, %s26
      %s36 = scalar_select %p33, %s35, %s26
      %p37 = scmp.ge.s32.totalorder %s36, 2
      %s38 = scalar_select %p37, 0, %s36
      %s39 = ssub.s32 %s26, %s38
      %s40 = ssub.s32 %s27, %s34
      %s41 = sor.u32 %s39, %s40
      %p42 = scmp.eq.s32.totalorder %s41, 0
      %s44 = sadd.s32 %s43, 1
      %s45 = scalar_select %p42, %s43, %s44
      %p48 = pneg %p42
      %p49 = scmp.eq.s32.totalorder %s19, 1
      %p50 = por %p48, %p49
      %p51 = scmp.ne.s32.totalorder %s43, %s46
      %p52 = scmp.eq.s32.totalorder %s19, 0
      %p53 = por %p51, %p52
      %p54 = scmp.ne.s32.totalorder %s43, %s46
      %p55 = scmp.eq.s32.totalorder %s24, 1
      %p56 = por %p54, %p55
      %p57 = scmp.ne.s32.totalorder %s46, %s47
      %p58 = scmp.eq.s32.totalorder %s24, 0
      %p59 = por %p57, %p58
      %p60 = scmp.ne.s32.totalorder %s46, %s47
      %p61 = scmp.eq.s32.totalorder %s25, 1
      %p62 = por %p60, %p61
      %p64 = scmp.ne.s32.totalorder %s47, %s63
      %p65 = scmp.eq.s32.totalorder %s25, 0
      %p66 = por %p64, %p65
      %s67 = ssub.s32 %s26, %s38
      %s68 = ssub.s32 %s27, %s34
      %s69 = sor.u32 %s67, %s68
      %p70 = scmp.eq.s32.totalorder %s69, 0
      %s72 = sadd.s32 %s71, 1
      %s73 = scalar_select %p70, %s71, %s72
      %p76 = pneg %p70
      %p77 = scmp.eq.s32.totalorder %s19, 1
      %p78 = por %p76, %p77
      %p79 = scmp.ne.s32.totalorder %s71, %s74
      %p80 = scmp.eq.s32.totalorder %s19, 0
      %p81 = por %p79, %p80
      %p82 = scmp.ne.s32.totalorder %s71, %s74
      %p83 = scmp.eq.s32.totalorder %s24, 1
      %p84 = por %p82, %p83
      %p85 = scmp.ne.s32.totalorder %s74, %s75
      %p86 = scmp.eq.s32.totalorder %s24, 0
      %p87 = por %p85, %p86
      %p88 = scmp.ne.s32.totalorder %s74, %s75
      %p89 = scmp.eq.s32.totalorder %s25, 1
      %p90 = por %p88, %p89
      %p92 = scmp.ne.s32.totalorder %s75, %s91
      %p93 = scmp.eq.s32.totalorder %s25, 0
      %p94 = por %p92, %p93
      %s96 = sadd.s32 %s95, 1
      %p99 = scmp.eq.s32.totalorder %s19, 1
      %p100 = scmp.ne.s32.totalorder %s95, %s97
      %p101 = scmp.eq.s32.totalorder %s19, 0
      %p102 = por %p100, %p101
      %p103 = scmp.ne.s32.totalorder %s95, %s97
      %p104 = scmp.eq.s32.totalorder %s24, 1
      %p105 = por %p103, %p104
      %p106 = scmp.ne.s32.totalorder %s97, %s98
      %p107 = scmp.eq.s32.totalorder %s24, 0
      %p108 = por %p106, %p107
      %p109 = scmp.ne.s32.totalorder %s97, %s98
      %p110 = scmp.eq.s32.totalorder %s25, 1
      %p111 = por %p109, %p110
      %p113 = scmp.ne.s32.totalorder %s98, %s112
      %p114 = scmp.eq.s32.totalorder %s25, 0
      %p115 = por %p113, %p114
      %s117 = sadd.s32 %s116, 1
      %p120 = scmp.eq.s32.totalorder %s19, 1
      %p121 = scmp.ne.s32.totalorder %s116, %s118
      %p122 = scmp.eq.s32.totalorder %s19, 0
      %p123 = por %p121, %p122
      %p124 = scmp.ne.s32.totalorder %s116, %s118
      %p125 = scmp.eq.s32.totalorder %s24, 1
      %p126 = por %p124, %p125
      %p127 = scmp.ne.s32.totalorder %s118, %s119
      %p128 = scmp.eq.s32.totalorder %s24, 0
      %p129 = por %p127, %p128
      %p130 = scmp.ne.s32.totalorder %s118, %s119
      %p131 = scmp.eq.s32.totalorder %s25, 1
      %p132 = por %p130, %p131
      %p134 = scmp.ne.s32.totalorder %s119, %s133
      %p135 = scmp.eq.s32.totalorder %s25, 0
      %p136 = por %p134, %p135
      %s137 = ssub.s32 %s26, %s38
      %s138 = ssub.s32 %s27, %s34
      %s139 = sor.u32 %s137, %s138
      %p140 = scmp.eq.s32.totalorder %s139, 0
      %s142 = sadd.s32 %s141, 1
      %s143 = scalar_select %p140, %s141, %s142
      %p146 = pneg %p140
      %p147 = scmp.eq.s32.totalorder %s19, 1
      %p148 = por %p146, %p147
      %p149 = scmp.ne.s32.totalorder %s141, %s144
      %p150 = scmp.eq.s32.totalorder %s19, 0
      %p151 = por %p149, %p150
      %p152 = scmp.ne.s32.totalorder %s141, %s144
      %p153 = scmp.eq.s32.totalorder %s24, 1
      %p154 = por %p152, %p153
      %p155 = scmp.ne.s32.totalorder %s144, %s145
      %p156 = scmp.eq.s32.totalorder %s24, 0
      %p157 = por %p155, %p156
      %p158 = scmp.ne.s32.totalorder %s144, %s145
      %p159 = scmp.eq.s32.totalorder %s25, 1
      %p160 = por %p158, %p159
      %p162 = scmp.ne.s32.totalorder %s145, %s161
      %p163 = scmp.eq.s32.totalorder %s25, 0
      %p164 = por %p162, %p163
      %p165 = scmp.le.s32.totalorder 1, %s19
      %p166 = scmp.lt.s32.totalorder %s19, 3
      %p167 = pnand %p165, %p166
      %p168 = pneg %p167
      // Predicated region
      $region9: #{tpu_custom_call.1} parent=5 // pred_check
        _
      $region10: #{tpu_custom_call.1} parent=5 // pred_check_branch
        %170 = sbr.rel (%p167) target = $region12
      $region11: #{tpu_custom_call.1} parent=5 // pred_region
        %s171 = ssub.s32 %s19, 1
        // Predicated region
        $region13: #{tpu_custom_call.1} parent=11 // pred_check
          %p172 = pneg %p108
        $region14: #{tpu_custom_call.1} parent=11 // pred_check_branch
          %174 = sbr.rel (%p172) target = $region16
        $region15: #{tpu_custom_call.1} parent=11 // pred_region
          _
        $region16: #{tpu_custom_call.1} parent=11 // pred_fallthru
          _
        // Predicated region
        $region17: #{tpu_custom_call.1} parent=11 // pred_check
          %p175 = pneg %p129
        $region18: #{tpu_custom_call.1} parent=11 // pred_check_branch
          %177 = sbr.rel (%p175) target = $region20
        $region19: #{tpu_custom_call.1} parent=11 // pred_region
          _
        $region20: #{tpu_custom_call.1} parent=11 // pred_fallthru
          _
      $region12: #{tpu_custom_call.1} parent=5 // pred_fallthru
        _
      %p178 = scmp.lt.s32.totalorder %s19, 2
      // Predicated region
      $region21: #{tpu_custom_call.1} parent=5 // pred_check
        %p179 = pneg %p178
      $region22: #{tpu_custom_call.1} parent=5 // pred_check_branch
        %181 = sbr.rel (%p179) target = $region24
      $region23: #{tpu_custom_call.1} parent=5 // pred_region
        // Predicated region
        $region25: #{tpu_custom_call.1} parent=23 // pred_check
          %p182 = pneg %p53
        $region26: #{tpu_custom_call.1} parent=23 // pred_check_branch
          %184 = sbr.rel (%p182) target = $region28
        $region27: #{tpu_custom_call.1} parent=23 // pred_region
          %s185 = sand.u32 %s43, 1
          %s186 = scalar_lea.sflag [#allocation3], %s185
          %s187 = sand.u32 %s43, 1
          %s188 = smul.addr %s187, 24
          %s189 = scalar_lea.vmem [#allocation2], %s188
          %191 = vsyncadd %s186, 0
          %s192 = smul.addr %s26, 3
          %s193 = sadd.s32 %s27, %s192
          %s194 = smul.addr %s193, 8
          %s195 = scalar_lea.hbm %s0, %s194
          %s196 = sshll.u32 %s195, 4
          %s197 = int_to_ptr.hbm [resolvable:$true] %s196
          %s198 = sshll.u32 %s189, 4
          %s199 = int_to_ptr.vmem [resolvable:$true] %s198
          %204 = dma.hbm_to_vmem [thread:$0]  %s197, 384, %s199, %s186, 128, 128, 8
        $region28: #{tpu_custom_call.1} parent=23 // pred_fallthru
          _
        // Predicated region
        $region29: #{tpu_custom_call.1} parent=23 // pred_check
          %p205 = pneg %p81
        $region30: #{tpu_custom_call.1} parent=23 // pred_check_branch
          %207 = sbr.rel (%p205) target = $region32
        $region31: #{tpu_custom_call.1} parent=23 // pred_region
          %s208 = sand.u32 %s71, 1
          %s209 = scalar_lea.sflag [#allocation6], %s208
          %s210 = sand.u32 %s71, 1
          %s211 = smul.addr %s210, 8
          %s212 = scalar_lea.vmem [#allocation5], %s211
          %214 = vsyncadd %s209, 0
          %s215 = sadd.s32 %s27, %s26
          %s216 = smul.addr %s215, 8
          %s217 = scalar_lea.hbm %s1, %s216
          %s219 = sshll.u32 %s217, 4
          %s220 = int_to_ptr.hbm [resolvable:$true] %s219
          %s221 = sshll.u32 %s212, 4
          %s222 = int_to_ptr.vmem [resolvable:$true] %s221
          %224 = dma.hbm_to_vmem [thread:$0]  %s220, 128, %s222, %s209
        $region32: #{tpu_custom_call.1} parent=23 // pred_fallthru
          _
      $region24: #{tpu_custom_call.1} parent=5 // pred_fallthru
        _
      %p225 = scmp.le.s32.totalorder 1, %s19
      %p226 = scmp.lt.s32.totalorder %s19, 3
      %p227 = pnand %p225, %p226
      %p228 = pneg %p227
      // Predicated region
      $region33: #{tpu_custom_call.1} parent=5 // pred_check
        _
      $region34: #{tpu_custom_call.1} parent=5 // pred_check_branch
        %230 = sbr.rel (%p227) target = $region36
      $region35: #{tpu_custom_call.1} parent=5 // pred_region
        %s231 = ssub.s32 %s19, 1
        %s232 = sand.u32 %s46, 1
        %s233 = scalar_lea.sflag [#allocation3], %s232
        %s234 = sand.u32 %s46, 1
        %s235 = smul.addr %s234, 24
        %s236 = scalar_lea.vmem [#allocation2], %s235
        // Predicated region
        $region37: #{tpu_custom_call.1} parent=35 // pred_check
          %p237 = pneg %p59
        $region38: #{tpu_custom_call.1} parent=35 // pred_check_branch
          %239 = sbr.rel (%p237) target = $region40
        $region39: #{tpu_custom_call.1} parent=35 // pred_region
          %241 = dma.done %s233, 384
        $region40: #{tpu_custom_call.1} parent=35 // pred_fallthru
          _
        %s242 = sand.u32 %s74, 1
        %s243 = scalar_lea.sflag [#allocation6], %s242
        %s244 = sand.u32 %s74, 1
        %s245 = smul.addr %s244, 8
        %s246 = scalar_lea.vmem [#allocation5], %s245
        // Predicated region
        $region41: #{tpu_custom_call.1} parent=35 // pred_check
          %p247 = pneg %p87
        $region42: #{tpu_custom_call.1} parent=35 // pred_check_branch
          %249 = sbr.rel (%p247) target = $region44
        $region43: #{tpu_custom_call.1} parent=35 // pred_region
          %251 = dma.done %s243, 128
        $region44: #{tpu_custom_call.1} parent=35 // pred_fallthru
          _
        %s252 = sand.u32 %s46, 1
        %s253 = scalar_lea.sflag [#allocation3], %s252
        %s254 = sand.u32 %s46, 1
        %s255 = smul.addr %s254, 24
        %s256 = scalar_lea.vmem [#allocation2], %s255
        %p257 = pneg %p59
        %p258 = pneg %p56
        %s259 = sand.u32 %s74, 1
        %s260 = scalar_lea.sflag [#allocation6], %s259
        %s261 = sand.u32 %s74, 1
        %s262 = smul.addr %s261, 8
        %s263 = scalar_lea.vmem [#allocation5], %s262
        %p264 = pneg %p87
        %p265 = pneg %p84
        %p266 = pneg %p108
        %p267 = pneg %p105
        %p268 = pneg %p129
        %p269 = pneg %p126
        %p270 = pneg %p157
        %p271 = pneg %p154
        %s272 = sand.u32 %s144, 1
        %s273 = scalar_lea.sflag [#allocation4], %s272
        %s274 = sand.u32 %s144, 1
        %s275 = smul.addr %s274, 8
        %s276 = scalar_lea.vmem [#allocation7], %s275
        %v277 = vld [vmem:[%s2] sm:$0xff]
        %v278 = vld [vmem:[%s236] sm:$0xff]
        %v279 = vld [vmem:[%s236 + $0x8] sm:$0xff]
        %v280 = vld [vmem:[%s236 + $0x10] sm:$0xff]
        %v281 = vld [vmem:[%s3] sm:$0xff]
        %283 = vset.pattern.permute.xlu0 0
        %284 = vperm.xlu0 %283, %v281
        %v285 = vpop.permute.xlu0 %284
        %vm287 = vcmask 195584
        %v289 = vsel %vm287, %v277, 0
        %291 = vmatpush.msra.mxu0 0.0
        %292 = vmatpush.msra.mxu0 0.0
        %293 = vmatpush.msra.mxu0 0.0
        %294 = vmatpush.msra.mxu0 0.0
        %295 = vmatpush.msra.mxu0 0.0
        %296 = vmatpush.msra.mxu0 0.0
        %297 = vmatpush.msra.mxu0 0.0
        %298 = vmatpush.msra.mxu0 0.0
        %299 = vmatpush.msra.mxu0 0.0
        %300 = vmatpush.msra.mxu0 0.0
        %301 = vmatpush.msra.mxu0 0.0
        %302 = vmatpush.msra.mxu0 0.0
        %303 = vmatpush.msra.mxu0 0.0
        %304 = vmatpush.msra.mxu0 %v280
        %305 = vmatpush.msra.mxu0 %v279
        %306 = vmatpush.msra.mxu0 %v278
        %307 = vmatmul.f32.gmra.mxu0 %v289
        %v308 = vpop.f32.mrf.mxu0
        %v309 = vadd.f32 %v285, %v308
        %310 = vdwg.mxu0
        %v311 = vld [vmem:[%s246] sm:$0xff]
        %v312 = vadd.f32 %v309, %v311
        %v313 = vmax.f32 %v312, 0.0
        %314 = vst [vmem:[%s276] sm:$0xff] %v313
        %s315 = sand.u32 %s144, 1
        %s316 = scalar_lea.sflag [#allocation4], %s315
        %s317 = sand.u32 %s144, 1
        %s318 = smul.addr %s317, 8
        %s319 = scalar_lea.vmem [#allocation7], %s318
        // Predicated region
        $region45: #{tpu_custom_call.1} parent=35 // pred_check
          %p320 = pneg %p154
        $region46: #{tpu_custom_call.1} parent=35 // pred_check_branch
          %322 = sbr.rel (%p320) target = $region48
        $region47: #{tpu_custom_call.1} parent=35 // pred_region
          %324 = vsyncadd %s316, 0
          %s325 = sadd.s32 %s29, %s28
          %s326 = smul.addr %s325, 8
          %s327 = scalar_lea.hbm %s4, %s326
          %s329 = sshll.u32 %s319, 4
          %s330 = int_to_ptr.vmem [resolvable:$true] %s329
          %s331 = sshll.u32 %s327, 4
          %s332 = int_to_ptr.hbm [resolvable:$true] %s331
          %334 = dma.vmem_to_hbm [thread:$0]  %s330, 128, %s332, %s316
        $region48: #{tpu_custom_call.1} parent=35 // pred_fallthru
          _
      $region36: #{tpu_custom_call.1} parent=5 // pred_fallthru
        _
      %p335 = scmp.le.s32.totalorder 2, %s19
      // Predicated region
      $region49: #{tpu_custom_call.1} parent=5 // pred_check
        %p336 = pneg %p335
      $region50: #{tpu_custom_call.1} parent=5 // pred_check_branch
        %338 = sbr.rel (%p336) target = $region52
      $region51: #{tpu_custom_call.1} parent=5 // pred_region
        %s339 = ssub.s32 %s19, 2
        // Predicated region
        $region53: #{tpu_custom_call.1} parent=51 // pred_check
          %p340 = pneg %p160
        $region54: #{tpu_custom_call.1} parent=51 // pred_check_branch
          %342 = sbr.rel (%p340) target = $region56
        $region55: #{tpu_custom_call.1} parent=51 // pred_region
          %s343 = sand.u32 %s145, 1
          %s344 = scalar_lea.sflag [#allocation4], %s343
          %s345 = sand.u32 %s145, 1
          %s346 = smul.addr %s345, 8
          %s347 = scalar_lea.vmem [#allocation7], %s346
          %349 = dma.done %s344, 128
        $region56: #{tpu_custom_call.1} parent=51 // pred_fallthru
          _
      $region52: #{tpu_custom_call.1} parent=5 // pred_fallthru
        _
    $region6: #{tpu_custom_call.1} parent=1 // loop_footer
      %s23 = sadd.s32 1, %s19
    $region7: #{tpu_custom_call.1} parent=1 // loop_footer_branch
      %18 = sbr.rel target = $region3
    $region8: #{tpu_custom_call.1} parent=1 // loop_exit
      _
    %350 = vsyncpa [#allocation3], 1
    %s351 = scalar_lea.sflag [#allocation3], 1
    %352 = vsyncpa %s351, 1
    %353 = vsyncpa [#allocation6], 1
    %s354 = scalar_lea.sflag [#allocation6], 1
    %355 = vsyncpa %s354, 1
    %356 = vsyncpa [#allocation4], 1
    %s357 = scalar_lea.sflag [#allocation4], 1
    %358 = vsyncpa %s357, 1

</llo_original>
